<compile_context>
chip_gen: v7x
topology: tpu7x:2x2x1
jax: 0.10.0
libtpu: 0.0.40
codegen_flags: <defaults>
</compile_context>

<pallas_src>
import jax
import jax.numpy as jnp
from jax.experimental import pallas as pl
from jax.experimental.pallas import tpu as pltpu


# ----------------------------------------------------------------------------
# Kernel
# ----------------------------------------------------------------------------
def _copy_cast_kernel(x_ref, o_ref):
    # Fused identity / cast: one HBM read + one HBM write.  The VPU cast (when
    # dtypes differ) rides for free under the DMA-bound roofline.
    o_ref[...] = x_ref[...].astype(o_ref.dtype)


# ----------------------------------------------------------------------------
# Sizing helpers
# ----------------------------------------------------------------------------
# Minimum sublane count so sub-32-bit dtypes (which pack along sublanes) get
# full-width unmasked stores instead of vst.msk partial stores.
_MIN_SUBLANES_BY_ITEMSIZE = {8: 8, 4: 8, 2: 16, 1: 32}

_MiB = 1024 * 1024
_MAX_TILE_BYTES = 8 * _MiB          # hard cap on per-step (in + out) tile bytes
_MAX_LANE_COLS = 8192               # cap when growing a synthetic lane axis
_DEFAULT_VMEM_BYTES = 64 * _MiB     # conservative fallback if TPU info is absent


def _min_sublanes(dtype):
    return _MIN_SUBLANES_BY_ITEMSIZE.get(jnp.dtype(dtype).itemsize, 8)


def _vmem_capacity_bytes():
    try:
        info = pltpu.get_tpu_info()
        cap = getattr(info, "vmem_capacity_bytes", None)
        if cap:
            return int(cap)
    except Exception:  # pragma: no cover - e.g. interpret mode / exotic backend
        pass
    return _DEFAULT_VMEM_BYTES


def _tile_bytes_budget(vmem_capacity):
    # Per-step in+out tile bytes.  Double-buffering doubles this, so cap//16
    # keeps the pipelined footprint at ~cap/8 (v5e/v6e: 8 MiB/step, v7x: 4 MiB),
    # large enough to sit on the ~85% HBM-roofline plateau.
    return max(1 * _MiB, min(_MAX_TILE_BYTES, vmem_capacity // 16))


def _lane_dense_2d_shape(shape):
    """Pick a 2-D (rows, cols) view of the same bytes with cols lane-dense."""
    total = 1
    for d in shape:
        total *= int(d)
    last = int(shape[-1]) if len(shape) >= 1 else 1

    if last >= 128 and last % 128 == 0:
        return total // last, last
    if total % 128 == 0:
        cols = 128
        while cols * 2 <= _MAX_LANE_COLS and total % (cols * 2) == 0:
            cols *= 2
        return total // cols, cols
    # TODO(synk): pad odd totals to a lane-dense shape instead of a single
    # full-extent (masked-store) block; only hit for tiny/awkward arrays.
    last = max(last, 1)
    return max(total // last, 1), last


def _pick_tiles(rows, cols, in_dtype, out_dtype, budget):
    """Choose (tile_rows, tile_cols): lane-dense, sublane-aligned, VMEM-safe."""
    itembytes = jnp.dtype(in_dtype).itemsize + jnp.dtype(out_dtype).itemsize

    if cols % 128 != 0:
        # Awkward small array: single full-extent block (exempt from (8,128)).
        return rows, cols

    min_rows = max(_min_sublanes(in_dtype), _min_sublanes(out_dtype))
    row_unit = min_rows if rows >= min_rows else rows  # full extent if tiny
    row_unit = max(row_unit, 1)

    if row_unit * cols * itembytes <= budget:
        # Full-width (lane-dense) tiles; clamp rows to the budget.
        tile_cols = cols
        max_units = max(1, budget // (cols * itembytes * row_unit))
        tile_rows = min(rows, max_units * row_unit)
        # Ensure >= 2 grid steps along rows when alignment allows, so the
        # 'parallel' annotation can shard DMA issue across v7x's 2 TCs.
        if tile_rows >= rows and rows >= 2 * row_unit:
            half = -(-rows // 2)
            tile_rows = min(rows, -(-half // row_unit) * row_unit)
    else:
        # Even one sublane-unit of rows at full width exceeds the budget:
        # tile the lane axis too (multiples of 128).
        tile_rows = row_unit
        max_cols = budget // (row_unit * itembytes)
        tile_cols = min(cols, max(128, (max_cols // 128) * 128))

    # If rows could not be split but the lane axis can, split it for megacore.
    if tile_rows >= rows and tile_cols >= cols and cols >= 256 and rows < 2 * row_unit:
        tile_cols = min(cols, max(128, ((cols // 2 + 127) // 128) * 128))

    return tile_rows, tile_cols


# ----------------------------------------------------------------------------
# Wrapper
# ----------------------------------------------------------------------------
def identity_passthrough(x, out_dtype=None, *, force_kernel=False):
    """Identity (optionally casting) copy as a lane-dense Pallas TPU kernel.

    Same-dtype calls are a true no-op (the input array is returned unless
    `force_kernel=True`).  The cast path runs a single fused copy/cast kernel:
    one HBM read + one HBM write, lane-dense blocks, 2-deep pipeline.
    """
    out_dtype = jnp.dtype(x.dtype if out_dtype is None else out_dtype)
    orig_shape = x.shape

    # True no-op: never pay 2x HBM traffic just to re-materialize the bytes.
    if out_dtype == jnp.dtype(x.dtype) and not force_kernel:
        return x
    if x.size == 0:
        return x.astype(out_dtype)

    rows, cols = _lane_dense_2d_shape(orig_shape)
    x2 = x.reshape(rows, cols)

    vmem_cap = _vmem_capacity_bytes()
    budget = _tile_bytes_budget(vmem_cap)
    tile_rows, tile_cols = _pick_tiles(rows, cols, x2.dtype, out_dtype, budget)
    grid = (pl.cdiv(rows, tile_rows), pl.cdiv(cols, tile_cols))

    itembytes = jnp.dtype(x2.dtype).itemsize + out_dtype.itemsize
    cost = pl.CostEstimate(
        flops=0, transcendentals=0, bytes_accessed=rows * cols * itembytes
    )

    out2 = pl.pallas_call(
        _copy_cast_kernel,
        out_shape=jax.ShapeDtypeStruct((rows, cols), out_dtype),
        grid_spec=pltpu.PrefetchScalarGridSpec(
            num_scalar_prefetch=0,
            grid=grid,
            in_specs=[pl.BlockSpec((tile_rows, tile_cols), lambda i, j: (i, j))],
            out_specs=pl.BlockSpec((tile_rows, tile_cols), lambda i, j: (i, j)),
        ),
        compiler_params=pltpu.CompilerParams(
            # Independent copy tiles; on v7x both TensorCores drive DMAs.
            dimension_semantics=("parallel", "parallel"),
            # Explicit limit: double-buffered tiles (<= 2 * budget) always fit
            # with headroom, including v5e's 16 MiB scoped default.
            vmem_limit_bytes=min(32 * _MiB, vmem_cap // 2),
        ),
        cost_estimate=cost,
    )(x2)

    return out2.reshape(orig_shape)


# ----------------------------------------------------------------------------
# Module mirror
# ----------------------------------------------------------------------------
class DummyTransformer:
    """JAX/Pallas mirror of the PyTorch DummyTransformer.

    No parameters, forward() raises, dtype is exposed as a property.
    """

    def __init__(self, dtype=jnp.float32):
        self._dtype = jnp.dtype(dtype)

    def forward(self, *args, **kwargs):
        # Exact semantics of the PyTorch module: calling it is an error.
        raise RuntimeError("Dummy transformer should not be called.")

    __call__ = forward

    @property
    def dtype(self):
        return self._dtype

    # TODO(synk): the original module defines no compute; this identity/cast
    # kernel exists only so the translation exercises a real Pallas hot path.
    def identity_passthrough(self, x):
        # Same-dtype inputs are returned as-is; differing dtype runs the fused
        # copy/cast kernel (cast inside the kernel, no extra HBM pass).
        return identity_passthrough(x, out_dtype=self._dtype)


if __name__ == "__main__":
    key = jax.random.PRNGKey(0)
    # Small deterministic 3-D input; the wrapper views it as lane-dense 2-D.
    x = jax.random.normal(key, (2, 64, 128), dtype=jnp.float32)

    model = DummyTransformer(dtype=jnp.float32)

    # 1) dtype property matches.
    assert model.dtype == jnp.dtype(jnp.float32)

    # 2) forward raises exactly like the PyTorch module.
    raised = False
    try:
        model.forward(x)
    except RuntimeError as e:
        raised = "Dummy transformer should not be called." in str(e)
    assert raised, "forward() did not raise the expected RuntimeError"

    # 3) Same-dtype is a true no-op: no kernel, no HBM copy.
    y_fast = model.identity_passthrough(x)
    assert y_fast is x

    # 4) Run the Pallas identity kernel (forced, same dtype) and check it.
    y = jax.block_until_ready(identity_passthrough(x, force_kernel=True))
    assert y.shape == x.shape and y.dtype == x.dtype
    assert bool(jnp.allclose(y, x)), "identity kernel mismatch"

    # 5) Exercise the fused-cast path (f32 -> bf16 inside the kernel).
    y_bf16 = jax.block_until_ready(identity_passthrough(x, out_dtype=jnp.bfloat16))
    assert y_bf16.dtype == jnp.bfloat16 and y_bf16.shape == x.shape
    assert bool(jnp.allclose(y_bf16.astype(jnp.float32), x, atol=1e-2, rtol=1e-2))

    print("KERNEL_OK")
</pallas_src>

<mosaic_0001>
module attributes {stable_mosaic.version = 11 : i64} {
  func.func @_copy_cast_kernel(%arg0: i32, %arg1: i32, %arg2: memref<64x128xf32, #tpu.memory_space<vmem>>, %arg3: memref<64x128xf32, #tpu.memory_space<vmem>>) attributes {dimension_semantics = [#tpu.dimension_semantics<parallel>, #tpu.dimension_semantics<parallel>], iteration_bounds = array<i64: 2, 1>, scalar_prefetch = 0 : i64, scratch_operands = 0 : i64, tpu.core_type = #tpu.core_type<tc>, window_params = [{transform_indices = @transform_0, window_bounds = array<i64: 64, 128>}, {transform_indices = @transform_1, window_bounds = array<i64: 64, 128>}]} {
    %c0 = arith.constant 0 : index
    %c0_0 = arith.constant 0 : index
    %0 = vector.load %arg2[%c0, %c0_0] : memref<64x128xf32, #tpu.memory_space<vmem>>, vector<64x128xf32>
    %c0_1 = arith.constant 0 : index
    %c0_2 = arith.constant 0 : index
    %1 = vector.load %arg3[%c0_1, %c0_2] : memref<64x128xf32, #tpu.memory_space<vmem>>, vector<64x128xf32>
    tpu.vector_store %arg3[%c0_1, %c0_2], %0 {strides = array<i32>} : memref<64x128xf32, #tpu.memory_space<vmem>>, vector<64x128xf32>,
    return
  }
  func.func @transform_0(%arg0: i32, %arg1: i32) -> (i32, i32) {
    %c0_i32 = arith.constant 0 : i32
    return %arg0, %arg1 : i32, i32
  }
  func.func @transform_1(%arg0: i32, %arg1: i32) -> (i32, i32) {
    %c0_i32 = arith.constant 0 : i32
    return %arg0, %arg1 : i32, i32
  }
}

</mosaic_0001>

<llo_original>
// kernel: tpu_custom_call.1
$region0: #{tpu_custom_call.1}
  #allocation0 [shape = 'u32[]', space=smem, size = 0x4, offset = 0x4, fixed_abs, tag = 'smem constant byte address 0x4 - core index']
  #allocation1 [shape = 'u32[144,128]{1,0:T(1,128)}', space=vmem, size = 0x12000, scoped, tag = 'internal scratch']
  %s0 = inlined_call_operand.hbm [shape: f32[128,128], index: 0, kind: input, shape index: {}]
  %s1 = inlined_call_operand.hbm [shape: f32[128,128], index: 1, kind: output, shape index: {}]
  %s2 = sld [smem:[#allocation0]]
  $region41: #{tpu_custom_call.1} parent=0
    _
  %s4 = ssub.s32 1, %s2
  %s5 = scalar_select 0, %s4, %s2
  $region1: #{tpu_custom_call.1} parent=0
    #allocation2 [shape = 'u8[65536]{0}', space=vmem, size = 0x10000, scoped, tag = 'input window, operand 0']
    #allocation3 [shape = 's32[2]{0}', space=sflag, size = 0x8, scoped, tag = 'scoped memory for tpu_custom_call.1']
    #allocation4 [shape = 's32[2]{0}', space=sflag, size = 0x8, scoped, tag = 'scoped memory for tpu_custom_call.1']
    #allocation5 [shape = 'u8[65536]{0}', space=vmem, size = 0x10000, scoped, tag = 'output window, operand 0']
    %6 = vsyncpa [#allocation3], 0
    %s7 = scalar_lea.sflag [#allocation3], 1
    %8 = vsyncpa %s7, 0
    %9 = vsyncpa [#allocation4], 0
    %s10 = scalar_lea.sflag [#allocation4], 1
    %11 = vsyncpa %s10, 0
    loop: start=0, step=1, limit=4
    $region2: #{tpu_custom_call.1} parent=1 // loop_pre_header
      _
    $region3: #{tpu_custom_call.1} parent=1 // loop_header
      %s13 = sphi 0, %s17
      %p14 = scmp.ge.s32.totalorder %s13, 4
      %s20 = sphi 0, %s32
      %s21 = sphi 0, %s28
      %s22 = sphi 0, %s20
      %s23 = sphi 0, %s21
      %s24 = sphi 0, %s22
      %s25 = sphi 0, %s23
      %s37 = sphi 0, %s39
      %s40 = sphi 0, %s37
      %s41 = sphi 0, %s40
      %s57 = sphi 0, %s41
      %s65 = sphi 0, %s67
      %s68 = sphi 0, %s65
      %s69 = sphi 0, %s68
      %s85 = sphi 0, %s69
    $region4: #{tpu_custom_call.1} parent=1 // loop_header_branch
      %16 = sbr.rel (%p14) target = $region8
    $region5: #{tpu_custom_call.1} parent=1 // loop_body
      %s18 = ssub.s32 %s13, 1
      %s19 = ssub.s32 %s13, 2
      %s26 = sadd.s32 1, %s21
      %p27 = scmp.ge.s32.totalorder %s26, 1
      %s28 = scalar_select %p27, 0, %s26
      %s29 = sadd.s32 1, %s20
      %s30 = scalar_select %p27, %s29, %s20
      %p31 = scmp.ge.s32.totalorder %s30, 2
      %s32 = scalar_select %p31, 0, %s30
      %s33 = ssub.s32 %s20, %s32
      %s34 = ssub.s32 %s21, %s28
      %s35 = sor.u32 %s33, %s34
      %p36 = scmp.eq.s32.totalorder %s35, 0
      %s38 = sadd.s32 %s37, 1
      %s39 = scalar_select %p36, %s37, %s38
      %p42 = pneg %p36
      %p43 = scmp.eq.s32.totalorder %s13, 1
      %p44 = por %p42, %p43
      %p45 = scmp.ne.s32.totalorder %s37, %s40
      %p46 = scmp.eq.s32.totalorder %s13, 0
      %p47 = por %p45, %p46
      %p48 = scmp.ne.s32.totalorder %s37, %s40
      %p49 = scmp.eq.s32.totalorder %s18, 1
      %p50 = por %p48, %p49
      %p51 = scmp.ne.s32.totalorder %s40, %s41
      %p52 = scmp.eq.s32.totalorder %s18, 0
      %p53 = por %p51, %p52
      %p54 = scmp.ne.s32.totalorder %s40, %s41
      %p55 = scmp.eq.s32.totalorder %s19, 1
      %p56 = por %p54, %p55
      %p58 = scmp.ne.s32.totalorder %s41, %s57
      %p59 = scmp.eq.s32.totalorder %s19, 0
      %p60 = por %p58, %p59
      %s61 = ssub.s32 %s20, %s32
      %s62 = ssub.s32 %s21, %s28
      %s63 = sor.u32 %s61, %s62
      %p64 = scmp.eq.s32.totalorder %s63, 0
      %s66 = sadd.s32 %s65, 1
      %s67 = scalar_select %p64, %s65, %s66
      %p70 = pneg %p64
      %p71 = scmp.eq.s32.totalorder %s13, 1
      %p72 = por %p70, %p71
      %p73 = scmp.ne.s32.totalorder %s65, %s68
      %p74 = scmp.eq.s32.totalorder %s13, 0
      %p75 = por %p73, %p74
      %p76 = scmp.ne.s32.totalorder %s65, %s68
      %p77 = scmp.eq.s32.totalorder %s18, 1
      %p78 = por %p76, %p77
      %p79 = scmp.ne.s32.totalorder %s68, %s69
      %p80 = scmp.eq.s32.totalorder %s18, 0
      %p81 = por %p79, %p80
      %p82 = scmp.ne.s32.totalorder %s68, %s69
      %p83 = scmp.eq.s32.totalorder %s19, 1
      %p84 = por %p82, %p83
      %p86 = scmp.ne.s32.totalorder %s69, %s85
      %p87 = scmp.eq.s32.totalorder %s19, 0
      %p88 = por %p86, %p87
      %p89 = scmp.le.s32.totalorder 1, %s13
      %p90 = scmp.lt.s32.totalorder %s13, 3
      %p91 = pnand %p89, %p90
      %p92 = pneg %p91
      // Predicated region
      $region9: #{tpu_custom_call.1} parent=5 // pred_check
        _
      $region10: #{tpu_custom_call.1} parent=5 // pred_check_branch
        %94 = sbr.rel (%p91) target = $region12
      $region11: #{tpu_custom_call.1} parent=5 // pred_region
        %s95 = ssub.s32 %s13, 1
      $region12: #{tpu_custom_call.1} parent=5 // pred_fallthru
        _
      %p96 = scmp.lt.s32.totalorder %s13, 2
      // Predicated region
      $region13: #{tpu_custom_call.1} parent=5 // pred_check
        %p97 = pneg %p96
      $region14: #{tpu_custom_call.1} parent=5 // pred_check_branch
        %99 = sbr.rel (%p97) target = $region16
      $region15: #{tpu_custom_call.1} parent=5 // pred_region
        // Predicated region
        $region17: #{tpu_custom_call.1} parent=15 // pred_check
          %p100 = pneg %p47
        $region18: #{tpu_custom_call.1} parent=15 // pred_check_branch
          %102 = sbr.rel (%p100) target = $region20
        $region19: #{tpu_custom_call.1} parent=15 // pred_region
          %s103 = sand.u32 %s37, 1
          %s104 = scalar_lea.sflag [#allocation3], %s103
          %s105 = sand.u32 %s37, 1
          %s106 = smul.addr %s105, 64
          %s107 = scalar_lea.vmem [#allocation2], %s106
          %s108 = smul.u32 8, %s20
          %s110 = ssub.s32 1024, 1024
          %111 = vsyncadd %s104, %s110
          %s112 = sadd.s32 %s21, %s108
          %s113 = smul.addr %s112, 128
          %s114 = scalar_lea.hbm %s0, %s113
          %s115 = sshll.u32 %s107, 4
          %s116 = int_to_ptr.vmem [resolvable:$true] %s115
          %121 = dma.hbm_to_vmem [thread:$0]  %s114, 1024, %s116, %s104, 128, 128, 8
        $region20: #{tpu_custom_call.1} parent=15 // pred_fallthru
          _
      $region16: #{tpu_custom_call.1} parent=5 // pred_fallthru
        _
      %p122 = scmp.le.s32.totalorder 1, %s13
      %p123 = scmp.lt.s32.totalorder %s13, 3
      %p124 = pnand %p122, %p123
      %p125 = pneg %p124
      // Predicated region
      $region21: #{tpu_custom_call.1} parent=5 // pred_check
        _
      $region22: #{tpu_custom_call.1} parent=5 // pred_check_branch
        %127 = sbr.rel (%p124) target = $region24
      $region23: #{tpu_custom_call.1} parent=5 // pred_region
        %s128 = ssub.s32 %s13, 1
        %s129 = sand.u32 %s40, 1
        %s130 = scalar_lea.sflag [#allocation3], %s129
        %s131 = sand.u32 %s40, 1
        %s132 = smul.addr %s131, 64
        %s133 = scalar_lea.vmem [#allocation2], %s132
        // Predicated region
        $region25: #{tpu_custom_call.1} parent=23 // pred_check
          %p134 = pneg %p53
        $region26: #{tpu_custom_call.1} parent=23 // pred_check_branch
          %136 = sbr.rel (%p134) target = $region28
        $region27: #{tpu_custom_call.1} parent=23 // pred_region
          %137 = dma.done %s130, 1024
        $region28: #{tpu_custom_call.1} parent=23 // pred_fallthru
          _
        %s138 = sand.u32 %s40, 1
        %s139 = scalar_lea.sflag [#allocation3], %s138
        %s140 = sand.u32 %s40, 1
        %s141 = smul.addr %s140, 64
        %s142 = scalar_lea.vmem [#allocation2], %s141
        %p143 = pneg %p53
        %p144 = pneg %p50
        %p145 = pneg %p81
        %p146 = pneg %p78
        %s147 = sand.u32 %s68, 1
        %s148 = scalar_lea.sflag [#allocation4], %s147
        %s149 = sand.u32 %s68, 1
        %s150 = smul.addr %s149, 64
        %s151 = scalar_lea.vmem [#allocation5], %s150
        %s152 = smul.u32 8, %s22
        %s153 = smul.u32 8, %s22
        %v154 = vld [vmem:[%s133] sm:$0xff]
        %v155 = vld [vmem:[%s133 + $0x8] sm:$0xff]
        %v156 = vld [vmem:[%s133 + $0x10] sm:$0xff]
        %v157 = vld [vmem:[%s133 + $0x18] sm:$0xff]
        %v158 = vld [vmem:[%s133 + $0x20] sm:$0xff]
        %v159 = vld [vmem:[%s133 + $0x28] sm:$0xff]
        %v160 = vld [vmem:[%s133 + $0x30] sm:$0xff]
        %v161 = vld [vmem:[%s133 + $0x38] sm:$0xff]
        %162 = vst [vmem:[%s151] sm:$0xff] %v154
        %163 = vst [vmem:[%s151 + $0x8] sm:$0xff] %v155
        %164 = vst [vmem:[%s151 + $0x10] sm:$0xff] %v156
        %165 = vst [vmem:[%s151 + $0x18] sm:$0xff] %v157
        %166 = vst [vmem:[%s151 + $0x20] sm:$0xff] %v158
        %167 = vst [vmem:[%s151 + $0x28] sm:$0xff] %v159
        %168 = vst [vmem:[%s151 + $0x30] sm:$0xff] %v160
        %169 = vst [vmem:[%s151 + $0x38] sm:$0xff] %v161
        %s170 = sand.u32 %s68, 1
        %s171 = scalar_lea.sflag [#allocation4], %s170
        %s172 = sand.u32 %s68, 1
        %s173 = smul.addr %s172, 64
        %s174 = scalar_lea.vmem [#allocation5], %s173
        // Predicated region
        $region29: #{tpu_custom_call.1} parent=23 // pred_check
          %p175 = pneg %p78
        $region30: #{tpu_custom_call.1} parent=23 // pred_check_branch
          %177 = sbr.rel (%p175) target = $region32
        $region31: #{tpu_custom_call.1} parent=23 // pred_region
          %s178 = smul.u32 8, %s22
          %s180 = ssub.s32 1024, 1024
          %181 = vsyncadd %s171, %s180
          %s182 = sadd.s32 %s23, %s178
          %s183 = smul.addr %s182, 128
          %s184 = scalar_lea.hbm %s1, %s183
          %s185 = sshll.u32 %s174, 4
          %s186 = int_to_ptr.vmem [resolvable:$true] %s185
          %191 = dma.vmem_to_hbm [thread:$0]  %s186, 1024, %s184, %s171, 128, 128, 8
        $region32: #{tpu_custom_call.1} parent=23 // pred_fallthru
          _
      $region24: #{tpu_custom_call.1} parent=5 // pred_fallthru
        _
      %p192 = scmp.le.s32.totalorder 2, %s13
      // Predicated region
      $region33: #{tpu_custom_call.1} parent=5 // pred_check
        %p193 = pneg %p192
      $region34: #{tpu_custom_call.1} parent=5 // pred_check_branch
        %195 = sbr.rel (%p193) target = $region36
      $region35: #{tpu_custom_call.1} parent=5 // pred_region
        %s196 = ssub.s32 %s13, 2
        // Predicated region
        $region37: #{tpu_custom_call.1} parent=35 // pred_check
          %p197 = pneg %p84
        $region38: #{tpu_custom_call.1} parent=35 // pred_check_branch
          %199 = sbr.rel (%p197) target = $region40
        $region39: #{tpu_custom_call.1} parent=35 // pred_region
          %s200 = sand.u32 %s69, 1
          %s201 = scalar_lea.sflag [#allocation4], %s200
          %s202 = sand.u32 %s69, 1
          %s203 = smul.addr %s202, 64
          %s204 = scalar_lea.vmem [#allocation5], %s203
          %205 = dma.done %s201, 1024
        $region40: #{tpu_custom_call.1} parent=35 // pred_fallthru
          _
      $region36: #{tpu_custom_call.1} parent=5 // pred_fallthru
        _
    $region6: #{tpu_custom_call.1} parent=1 // loop_footer
      %s17 = sadd.s32 1, %s13
    $region7: #{tpu_custom_call.1} parent=1 // loop_footer_branch
      %12 = sbr.rel target = $region3
    $region8: #{tpu_custom_call.1} parent=1 // loop_exit
      _
    %206 = vsyncpa [#allocation3], 1
    %s207 = scalar_lea.sflag [#allocation3], 1
    %208 = vsyncpa %s207, 1
    %209 = vsyncpa [#allocation4], 1
    %s210 = scalar_lea.sflag [#allocation4], 1
    %211 = vsyncpa %s210, 1

</llo_original>
